<compile_context>
chip_gen: v5e
topology: v5e:2x2
jax: 0.10.0
libtpu: 0.0.40
codegen_flags: <defaults>
</compile_context>

<pallas_src>
from functools import partial

import jax
import jax.numpy as jnp
from jax.experimental import pallas as pl
from jax.experimental.pallas import tpu as pltpu

V_NUM = 4                      # number of views summed in the demo
SIGMA_LEN = 4                  # length of the sigma parameter (fixed by __init__)
LANE = 128                     # TPU lane width
TARGET_BLOCK_BYTES = 4 * 1024 * 1024   # ~4 MiB of input per grid step


def _round_up(x, m):
    return ((x + m - 1) // m) * m


def uncertainty_loss_kernel(w_ref, x_ref, o_ref, *, v_num):
    # w_ref: (v_num + 1,) f32 in SMEM  -> [w_0 .. w_{v_num-1}, reg]
    # x_ref: (v_num, TILE_R, LANE) input dtype in VMEM
    # o_ref: (TILE_R, LANE) f32 in VMEM
    # Seed the accumulator with view 0 plus the scalar regularizer; scalar
    # weights come from SMEM so no per-iteration broadcast_in_dim is emitted.
    acc = x_ref[0].astype(jnp.float32) * w_ref[0] + w_ref[v_num]
    for i in range(1, v_num):                         # static unrolled view loop
        acc = acc + x_ref[i].astype(jnp.float32) * w_ref[i]
    o_ref[...] = acc


def uncertainty_loss(x, sigma):
    """x: (v_num, H, W) float (f32 or bf16); sigma: (SIGMA_LEN,) -> (H, W) f32."""
    assert jnp.issubdtype(x.dtype, jnp.floating)
    v_num = x.shape[0]
    spatial_shape = x.shape[1:]
    n = 1
    for d in spatial_shape:
        n *= d

    # Per-view weights + scalar regularizer, computed once (5 scalars) and
    # passed via SMEM.  (This is not input pre-scaling; x is untouched.)
    sigma = sigma.astype(jnp.float32)
    w = 0.5 * jnp.exp(-sigma[:v_num])                          # (v_num,)
    reg = 0.01 * jnp.sum(jnp.exp(0.5 * sigma), keepdims=True)  # (1,)
    wreg = jnp.concatenate([w, reg])                           # (v_num + 1,)

    # Lane-dense flattened layout: (v_num, rows, 128), rows a multiple of the
    # row tile.  Tile rows sized from the *input* itemsize for ~4 MiB blocks.
    itemsize = x.dtype.itemsize
    rows_needed = pl.cdiv(n, LANE)
    target_rows = max(8, (TARGET_BLOCK_BYTES // (v_num * LANE * itemsize)) // 8 * 8)
    tile_r = min(target_rows, _round_up(rows_needed, 8))
    rows = _round_up(rows_needed, tile_r)
    n_pad = rows * LANE

    x_flat = x.reshape(v_num, n)
    if n_pad != n:
        x_flat = jnp.pad(x_flat, ((0, 0), (0, n_pad - n)))
    x3 = x_flat.reshape(v_num, rows, LANE)

    grid = (rows // tile_r,)
    out = pl.pallas_call(
        partial(uncertainty_loss_kernel, v_num=v_num),
        out_shape=jax.ShapeDtypeStruct((rows, LANE), jnp.float32),
        grid=grid,
        in_specs=[
            pl.BlockSpec(memory_space=pltpu.MemorySpace.SMEM),          # weights
            pl.BlockSpec((v_num, tile_r, LANE), lambda r: (0, r, 0)),   # x blocks
        ],
        out_specs=pl.BlockSpec((tile_r, LANE), lambda r: (r, 0)),
        compiler_params=pltpu.CompilerParams(
            dimension_semantics=("parallel",),
            vmem_limit_bytes=32 * 1024 * 1024,
        ),
    )(wreg, x3)

    out_flat = out.reshape(n_pad)
    if n_pad != n:
        out_flat = out_flat[:n]
    return out_flat.reshape(spatial_shape)


def init_sigma():
    # Matches nn.Parameter(-log(2 * [1, 0.5, 0.25, 0.125]))
    base = jnp.array([1.0, 0.5, 0.25, 0.125], dtype=jnp.float32)
    return -jnp.log(2.0 * base)


def _reference(x, sigma):
    xf = x.astype(jnp.float32)
    sigma = sigma.astype(jnp.float32)
    w = (0.5 * jnp.exp(-sigma[: x.shape[0]])).reshape(-1, 1, 1)
    return jnp.sum(xf * w, axis=0) + 0.01 * jnp.sum(jnp.exp(0.5 * sigma))


if __name__ == "__main__":
    key = jax.random.PRNGKey(0)
    k1, k2, k3 = jax.random.split(key, 3)
    sigma = init_sigma()

    # Case 1: f32, lane-aligned spatial map.
    x1 = jax.random.normal(k1, (V_NUM, 16, 128), dtype=jnp.float32)
    out1 = jax.block_until_ready(uncertainty_loss(x1, sigma))
    assert out1.shape == (16, 128)
    assert jnp.allclose(out1, _reference(x1, sigma), atol=1e-5, rtol=1e-5)

    # Case 2: f32, ragged spatial dims (exercises the flatten + pad path).
    x2 = jax.random.normal(k2, (V_NUM, 17, 96), dtype=jnp.float32)
    out2 = jax.block_until_ready(uncertainty_loss(x2, sigma))
    assert out2.shape == (17, 96)
    assert jnp.allclose(out2, _reference(x2, sigma), atol=1e-5, rtol=1e-5)

    # Case 3: bf16 input stays bf16 over HBM, cast to f32 in vregs in-kernel.
    x3 = jax.random.normal(k3, (V_NUM, 16, 128), dtype=jnp.bfloat16)
    out3 = jax.block_until_ready(uncertainty_loss(x3, sigma))
    assert out3.dtype == jnp.float32
    assert jnp.allclose(out3, _reference(x3, sigma), atol=1e-4, rtol=1e-4)

    print("KERNEL_OK")
</pallas_src>

<mosaic_0001>
module attributes {stable_mosaic.version = 11 : i64} {
  func.func @uncertainty_loss_kernel(%arg0: i32, %arg1: memref<5xf32, #tpu.memory_space<smem>>, %arg2: memref<4x16x128xf32, #tpu.memory_space<vmem>>, %arg3: memref<16x128xf32, #tpu.memory_space<vmem>>) attributes {dimension_semantics = [#tpu.dimension_semantics<parallel>], iteration_bounds = array<i64: 1>, scalar_prefetch = 0 : i64, scratch_operands = 0 : i64, tpu.core_type = #tpu.core_type<tc>, window_params = [{transform_indices = @transform_0, window_bounds = array<i64: 5>}, {transform_indices = @transform_1, window_bounds = array<i64: 4, 16, 128>}, {transform_indices = @transform_2, window_bounds = array<i64: 16, 128>}]} {
    %c0 = arith.constant 0 : index
    %c0_0 = arith.constant 0 : index
    %c0_1 = arith.constant 0 : index
    %0 = vector.load %arg2[%c0, %c0_0, %c0_1] : memref<4x16x128xf32, #tpu.memory_space<vmem>>, vector<1x16x128xf32>
    %1 = vector.shape_cast %0 : vector<1x16x128xf32> to vector<16x128xf32>
    %c0_2 = arith.constant 0 : index
    %2 = memref.load %arg1[%c0_2] : memref<5xf32, #tpu.memory_space<smem>>
    %3 = vector.broadcast %2 : f32 to vector<16x128xf32>
    %4 = arith.mulf %1, %3 : vector<16x128xf32>
    %c4 = arith.constant 4 : index
    %5 = memref.load %arg1[%c4] : memref<5xf32, #tpu.memory_space<smem>>
    %6 = vector.broadcast %5 : f32 to vector<16x128xf32>
    %7 = arith.addf %4, %6 : vector<16x128xf32>
    %c1 = arith.constant 1 : index
    %c0_3 = arith.constant 0 : index
    %c0_4 = arith.constant 0 : index
    %8 = vector.load %arg2[%c1, %c0_3, %c0_4] : memref<4x16x128xf32, #tpu.memory_space<vmem>>, vector<1x16x128xf32>
    %9 = vector.shape_cast %8 : vector<1x16x128xf32> to vector<16x128xf32>
    %c1_5 = arith.constant 1 : index
    %10 = memref.load %arg1[%c1_5] : memref<5xf32, #tpu.memory_space<smem>>
    %11 = vector.broadcast %10 : f32 to vector<16x128xf32>
    %12 = arith.mulf %9, %11 : vector<16x128xf32>
    %13 = arith.addf %7, %12 : vector<16x128xf32>
    %c2 = arith.constant 2 : index
    %c0_6 = arith.constant 0 : index
    %c0_7 = arith.constant 0 : index
    %14 = vector.load %arg2[%c2, %c0_6, %c0_7] : memref<4x16x128xf32, #tpu.memory_space<vmem>>, vector<1x16x128xf32>
    %15 = vector.shape_cast %14 : vector<1x16x128xf32> to vector<16x128xf32>
    %c2_8 = arith.constant 2 : index
    %16 = memref.load %arg1[%c2_8] : memref<5xf32, #tpu.memory_space<smem>>
    %17 = vector.broadcast %16 : f32 to vector<16x128xf32>
    %18 = arith.mulf %15, %17 : vector<16x128xf32>
    %19 = arith.addf %13, %18 : vector<16x128xf32>
    %c3 = arith.constant 3 : index
    %c0_9 = arith.constant 0 : index
    %c0_10 = arith.constant 0 : index
    %20 = vector.load %arg2[%c3, %c0_9, %c0_10] : memref<4x16x128xf32, #tpu.memory_space<vmem>>, vector<1x16x128xf32>
    %21 = vector.shape_cast %20 : vector<1x16x128xf32> to vector<16x128xf32>
    %c3_11 = arith.constant 3 : index
    %22 = memref.load %arg1[%c3_11] : memref<5xf32, #tpu.memory_space<smem>>
    %23 = vector.broadcast %22 : f32 to vector<16x128xf32>
    %24 = arith.mulf %21, %23 : vector<16x128xf32>
    %25 = arith.addf %19, %24 : vector<16x128xf32>
    %c0_12 = arith.constant 0 : index
    %c0_13 = arith.constant 0 : index
    %26 = vector.load %arg3[%c0_12, %c0_13] : memref<16x128xf32, #tpu.memory_space<vmem>>, vector<16x128xf32>
    tpu.vector_store %arg3[%c0_12, %c0_13], %25 {strides = array<i32>} : memref<16x128xf32, #tpu.memory_space<vmem>>, vector<16x128xf32>,
    return
  }
  func.func @transform_0(%arg0: i32) -> i32 {
    %c0_i32 = arith.constant 0 : i32
    %c0_i32_0 = arith.constant 0 : i32
    return %c0_i32 : i32
  }
  func.func @transform_1(%arg0: i32) -> (i32, i32, i32) {
    %c0_i32 = arith.constant 0 : i32
    %c0_i32_0 = arith.constant 0 : i32
    %c0_i32_1 = arith.constant 0 : i32
    return %c0_i32, %arg0, %c0_i32_0 : i32, i32, i32
  }
  func.func @transform_2(%arg0: i32) -> (i32, i32) {
    %c0_i32 = arith.constant 0 : i32
    %c0_i32_0 = arith.constant 0 : i32
    return %arg0, %c0_i32 : i32, i32
  }
}

</mosaic_0001>

<llo_original>
// kernel: tpu_custom_call.1
$region0: #{tpu_custom_call.1}
  #allocation0 [shape = 'u32[]', space=smem, size = 0x4, offset = 0x4, fixed_abs, tag = 'smem constant byte address 0x4 - core index']
  #allocation1 [shape = 'u32[72,128]{1,0:T(1,128)}', space=vmem, size = 0x9000, scoped, tag = 'internal scratch']
  %s0 = inlined_call_operand.hbm [shape: f32[5], index: 0, kind: input, shape index: {}]
  %s1 = inlined_call_operand.hbm [shape: f32[4,16,128], index: 1, kind: input, shape index: {}]
  %s2 = inlined_call_operand.hbm [shape: f32[16,128], index: 2, kind: output, shape index: {}]
  %s3 = sld [smem:[#allocation0]]
  $region26: #{tpu_custom_call.1} parent=0
    _
  %s5 = ssub.s32 1, %s3
  %s6 = scalar_select 0, %s5, %s3
  $region1: #{tpu_custom_call.1} parent=0
    #allocation2 [shape = 'u8[512]{0}', space=smem, size = 0x200, scoped, tag = 'input window, operand 0, single buffered']
    #allocation3 [shape = 's32[1]{0}', space=sflag, size = 0x4, scoped, tag = 'scoped memory for tpu_custom_call.1']
    #allocation4 [shape = 's32[1]{0}', space=sflag, size = 0x4, scoped, tag = 'scoped memory for tpu_custom_call.1']
    #allocation5 [shape = 's32[1]{0}', space=sflag, size = 0x4, scoped, tag = 'scoped memory for tpu_custom_call.1']
    #allocation6 [shape = 'u8[32768]{0}', space=vmem, size = 0x8000, scoped, tag = 'input window, operand 1, single buffered']
    #allocation7 [shape = 'u8[8192]{0}', space=vmem, size = 0x2000, scoped, tag = 'output window, operand 0, single buffered']
    %7 = vsyncpa [#allocation5], 0
    %8 = vsyncpa [#allocation3], 0
    %9 = vsyncpa [#allocation4], 0
    // Predicated region
    $region2: #{tpu_custom_call.1} parent=1 // pred_check
      _
    $region3: #{tpu_custom_call.1} parent=1 // pred_check_branch
      %11 = sbr.rel (0) target = $region5
    $region4: #{tpu_custom_call.1} parent=1 // pred_region
      %13 = vsyncadd [#allocation5], 0
      %s15 = sshll.u32 %s0, 4
      %s16 = int_to_ptr.hbm [resolvable:$true] %s15
      %18 = dma.hbm_to_smem %s16, 16, [#allocation2], [#allocation5]
    $region5: #{tpu_custom_call.1} parent=1 // pred_fallthru
      _
    // Predicated region
    $region6: #{tpu_custom_call.1} parent=1 // pred_check
      _
    $region7: #{tpu_custom_call.1} parent=1 // pred_check_branch
      %20 = sbr.rel (0) target = $region9
    $region8: #{tpu_custom_call.1} parent=1 // pred_region
      %22 = vsyncadd [#allocation3], 0
      %s23 = sshll.u32 %s1, 4
      %s24 = int_to_ptr.hbm [resolvable:$true] %s23
      %s25 = sshll.u32 [#allocation6], 4
      %s26 = int_to_ptr.vmem [resolvable:$true] %s25
      %31 = dma.hbm_to_vmem [thread:$0]  %s24, 1024, %s26, [#allocation3], 128, 128, 8
    $region9: #{tpu_custom_call.1} parent=1 // pred_fallthru
      _
    // Predicated region
    $region10: #{tpu_custom_call.1} parent=1 // pred_check
      _
    $region11: #{tpu_custom_call.1} parent=1 // pred_check_branch
      %33 = sbr.rel (0) target = $region13
    $region12: #{tpu_custom_call.1} parent=1 // pred_region
      %35 = dma.done [#allocation5], 16
    $region13: #{tpu_custom_call.1} parent=1 // pred_fallthru
      _
    // Predicated region
    $region14: #{tpu_custom_call.1} parent=1 // pred_check
      _
    $region15: #{tpu_custom_call.1} parent=1 // pred_check_branch
      %37 = sbr.rel (0) target = $region17
    $region16: #{tpu_custom_call.1} parent=1 // pred_region
      %39 = dma.done [#allocation3], 1024
    $region17: #{tpu_custom_call.1} parent=1 // pred_fallthru
      _
    %40 = sfence
    %v41 = vld [vmem:[#allocation6] sm:$0xff]
    %v42 = vld [vmem:[#allocation6 + $0x8] sm:$0xff]
    %s43 = sld [smem:[#allocation2]]
    %v44 = vstv %s43
    %v45 = vmul.f32 %v41, %v44
    %v46 = vmul.f32 %v42, %v44
    %s47 = sld [smem:[#allocation2 + $0x4]]
    %v48 = vstv %s47
    %v49 = vadd.f32 %v45, %v48
    %v50 = vadd.f32 %v46, %v48
    %s51 = scalar_lea.vmem [#allocation6], 16
    %v52 = vld [vmem:[%s51] sm:$0xff]
    %v53 = vld [vmem:[%s51 + $0x8] sm:$0xff]
    %s54 = sld [smem:[#allocation2 + $0x1]]
    %v55 = vstv %s54
    %v56 = vmul.f32 %v52, %v55
    %v57 = vmul.f32 %v53, %v55
    %v58 = vadd.f32 %v49, %v56
    %v59 = vadd.f32 %v50, %v57
    %s60 = scalar_lea.vmem [#allocation6], 32
    %v61 = vld [vmem:[%s60] sm:$0xff]
    %v62 = vld [vmem:[%s60 + $0x8] sm:$0xff]
    %s63 = sld [smem:[#allocation2 + $0x2]]
    %v64 = vstv %s63
    %v65 = vmul.f32 %v61, %v64
    %v66 = vmul.f32 %v62, %v64
    %v67 = vadd.f32 %v58, %v65
    %v68 = vadd.f32 %v59, %v66
    %s69 = scalar_lea.vmem [#allocation6], 48
    %v70 = vld [vmem:[%s69] sm:$0xff]
    %v71 = vld [vmem:[%s69 + $0x8] sm:$0xff]
    %s72 = sld [smem:[#allocation2 + $0x3]]
    %v73 = vstv %s72
    %v74 = vmul.f32 %v70, %v73
    %v75 = vmul.f32 %v71, %v73
    %v76 = vadd.f32 %v67, %v74
    %v77 = vadd.f32 %v68, %v75
    %78 = vst [vmem:[#allocation7] sm:$0xff] %v76
    %79 = vst [vmem:[#allocation7 + $0x8] sm:$0xff] %v77
    // Predicated region
    $region18: #{tpu_custom_call.1} parent=1 // pred_check
      _
    $region19: #{tpu_custom_call.1} parent=1 // pred_check_branch
      %81 = sbr.rel (0) target = $region21
    $region20: #{tpu_custom_call.1} parent=1 // pred_region
      %83 = vsyncadd [#allocation4], 0
      %s84 = sshll.u32 [#allocation7], 4
      %s85 = int_to_ptr.vmem [resolvable:$true] %s84
      %s86 = sshll.u32 %s2, 4
      %s87 = int_to_ptr.hbm [resolvable:$true] %s86
      %92 = dma.vmem_to_hbm [thread:$0]  %s85, 256, %s87, [#allocation4], 128, 128, 8
    $region21: #{tpu_custom_call.1} parent=1 // pred_fallthru
      _
    // Predicated region
    $region22: #{tpu_custom_call.1} parent=1 // pred_check
      _
    $region23: #{tpu_custom_call.1} parent=1 // pred_check_branch
      %94 = sbr.rel (0) target = $region25
    $region24: #{tpu_custom_call.1} parent=1 // pred_region
      %96 = dma.done [#allocation4], 256
    $region25: #{tpu_custom_call.1} parent=1 // pred_fallthru
      _
    %97 = vsyncpa [#allocation3], 1
    %98 = vsyncpa [#allocation4], 1
    %99 = vsyncpa [#allocation5], 1

</llo_original>
